<compile_context>
chip_gen: v7x
topology: tpu7x:2x2x1
jax: 0.10.0
libtpu: 0.0.40
codegen_flags: <defaults>
</compile_context>

<pallas_src>
import functools

import jax
import jax.numpy as jnp
from jax.experimental import pallas as pl
from jax.experimental.pallas import tpu as pltpu


def _shortcut_kernel(x_ref, o_ref, *, c_in, c_pad):
    # x_ref: (N, TH, W_out, 2*C)   -- even input rows only; the lane dim packs
    #                                 [even-column channels (C) | odd-column channels (C)]
    # o_ref: (N, TH, W_out, C_out) with C_out = C + 2*c_pad
    x = x_ref[...]
    sub = x[..., :c_in]            # keep even columns: lane-prefix slice (free filler)
    if c_pad == 0:
        o_ref[...] = sub
    else:
        zeros = jnp.zeros(sub.shape[:-1] + (c_pad,), dtype=sub.dtype)
        # Build the channel-padded block in registers and emit a single dense,
        # full-lane-width store (no masked partial stores, no double write).
        o_ref[...] = jnp.concatenate([zeros, sub, zeros], axis=-1)


def _pick_row_tile(h_out, pair_bytes, target_bytes=8 * 1024 * 1024):
    """Largest divisor of h_out whose in+out block pair stays under target_bytes,
    keeping the grid length >= 2 when possible (megacore sharding on v7x)."""
    max_th = max(1, min(h_out, target_bytes // max(pair_bytes, 1)))
    if h_out >= 2:
        max_th = min(max_th, max(1, h_out // 2))
    th = 1
    for d in range(1, int(max_th) + 1):
        if h_out % d == 0:
            th = d
    return th


def lambda_shortcut_nhwc(x_nhwc, planes):
    """Option-A shortcut on a channels-last (N, H, W, C) tensor.

    Returns (N, ceil(H/2), ceil(W/2), C + 2*(planes//4)). Use this entry point directly
    in a channels-last pipeline: it requires no layout transposes at all.
    """
    n, h, w, c = x_nhwc.shape
    c_pad = planes // 4
    h_out = (h + 1) // 2
    w_out = (w + 1) // 2
    c_out = c + 2 * c_pad

    # Odd spatial dims: pad one trailing row/col (padded index is odd -> never selected),
    # matching PyTorch's x[:, :, ::2, ::2] ceil semantics. No-op for standard ResNet shapes.
    if (h % 2) or (w % 2):
        x_nhwc = jnp.pad(x_nhwc, ((0, 0), (0, h % 2), (0, w % 2), (0, 0)))

    # Free leading-dim split/merge (no data movement): expose the row-parity axis so the
    # BlockSpec only DMAs even rows, and merge the column-parity with C so each even row
    # is one long contiguous DMA and the block minor dims are (W_out, 2*C) -- sublane-dense.
    x_view = x_nhwc.reshape(n, h_out, 2, w_out, 2 * c)

    itemsize = jnp.dtype(x_nhwc.dtype).itemsize
    in_row_bytes = n * (2 * w_out) * c * itemsize      # one even row, all columns
    out_row_bytes = n * w_out * c_out * itemsize
    th = _pick_row_tile(h_out, in_row_bytes + out_row_bytes)

    kernel = functools.partial(_shortcut_kernel, c_in=c, c_pad=c_pad)
    return pl.pallas_call(
        kernel,
        out_shape=jax.ShapeDtypeStruct((n, h_out, w_out, c_out), x_nhwc.dtype),
        grid=(h_out // th,),
        in_specs=[
            # Block (n, th, 1, w_out, 2*c); the parity dim is squeezed (None) and its
            # block index is pinned to 0 -> only even input rows are ever DMA'd.
            pl.BlockSpec((n, th, None, w_out, 2 * c), lambda hb: (0, hb, 0, 0, 0)),
        ],
        out_specs=pl.BlockSpec((n, th, w_out, c_out), lambda hb: (0, hb, 0, 0)),
        compiler_params=pltpu.CompilerParams(
            dimension_semantics=("parallel",),
            vmem_limit_bytes=64 * 1024 * 1024,
        ),
    )(x_view)


def lambda_shortcut(x_nchw, planes):
    """PyTorch-equivalent NCHW entry point: (N, C, H, W) -> (N, C+2*(planes//4), H//2, W//2)."""
    # TODO(synk): these two transposes are full-tensor XLA relayouts kept only to honor the
    # PyTorch NCHW interface; in a channels-last model call lambda_shortcut_nhwc directly
    # (an NCHW-native kernel would need lane-stride-2 gathers, deliberately not emitted here).
    x_nhwc = jnp.transpose(x_nchw, (0, 2, 3, 1))        # (N, H, W, C)
    out_nhwc = lambda_shortcut_nhwc(x_nhwc, planes)     # (N, H//2, W//2, C_out)
    return jnp.transpose(out_nhwc, (0, 3, 1, 2))        # (N, C_out, H//2, W//2)


if __name__ == "__main__":
    key = jax.random.PRNGKey(0)
    N, C, H, W = 2, 4, 16, 16
    planes = 8                      # typical option-A transition: pad = planes // 4 = 2
    x = jax.random.normal(key, (N, C, H, W), dtype=jnp.float32)

    out = jax.block_until_ready(lambda_shortcut(x, planes))

    # pure-JAX reference of the PyTorch lambda
    pad = planes // 4
    ref = jnp.pad(x[:, :, ::2, ::2], ((0, 0), (pad, pad), (0, 0), (0, 0)))
    assert out.shape == ref.shape, (out.shape, ref.shape)
    assert out.dtype == ref.dtype
    assert jnp.allclose(out, ref), float(jnp.max(jnp.abs(out - ref)))
    print("KERNEL_OK")
</pallas_src>

<mosaic_0001>
module attributes {stable_mosaic.version = 11 : i64} {
  func.func @_shortcut_kernel(%arg0: i32, %arg1: memref<2x4x1x8x8xf32, #tpu.memory_space<vmem>>, %arg2: memref<2x4x8x8xf32, #tpu.memory_space<vmem>>) attributes {dimension_semantics = [#tpu.dimension_semantics<parallel>], iteration_bounds = array<i64: 2>, scalar_prefetch = 0 : i64, scratch_operands = 0 : i64, tpu.core_type = #tpu.core_type<tc>, window_params = [{transform_indices = @transform_0, window_bounds = array<i64: 2, 4, 1, 8, 8>}, {transform_indices = @transform_1, window_bounds = array<i64: 2, 4, 8, 8>}]} {
    %c0 = arith.constant 0 : index
    %c0_0 = arith.constant 0 : index
    %c0_1 = arith.constant 0 : index
    %c0_2 = arith.constant 0 : index
    %c0_3 = arith.constant 0 : index
    %0 = vector.load %arg1[%c0, %c0_0, %c0_1, %c0_2, %c0_3] : memref<2x4x1x8x8xf32, #tpu.memory_space<vmem>>, vector<2x4x1x8x8xf32>
    %1 = vector.shape_cast %0 : vector<2x4x1x8x8xf32> to vector<2x4x8x8xf32>
    %2 = vector.extract_strided_slice %1 {offsets = [0, 0, 0, 0], sizes = [2, 4, 8, 4], strides = [1, 1, 1, 1]} : vector<2x4x8x8xf32> to vector<2x4x8x4xf32>
    %cst = arith.constant 0.000000e+00 : f32
    %3 = vector.broadcast %cst : f32 to vector<2x4x8x2xf32>
    %4 = tpu.concatenate %3, %2, %3 in 3 : vector<2x4x8x2xf32>, vector<2x4x8x4xf32>, vector<2x4x8x2xf32> -> vector<2x4x8x8xf32>
    %c0_4 = arith.constant 0 : index
    %c0_5 = arith.constant 0 : index
    %c0_6 = arith.constant 0 : index
    %c0_7 = arith.constant 0 : index
    %5 = vector.load %arg2[%c0_4, %c0_5, %c0_6, %c0_7] : memref<2x4x8x8xf32, #tpu.memory_space<vmem>>, vector<2x4x8x8xf32>
    tpu.vector_store %arg2[%c0_4, %c0_5, %c0_6, %c0_7], %4 {strides = array<i32>} : memref<2x4x8x8xf32, #tpu.memory_space<vmem>>, vector<2x4x8x8xf32>,
    return
  }
  func.func @transform_0(%arg0: i32) -> (i32, i32, i32, i32, i32) {
    %c0_i32 = arith.constant 0 : i32
    %c0_i32_0 = arith.constant 0 : i32
    %c0_i32_1 = arith.constant 0 : i32
    %c0_i32_2 = arith.constant 0 : i32
    %c0_i32_3 = arith.constant 0 : i32
    return %c0_i32, %arg0, %c0_i32_0, %c0_i32_1, %c0_i32_2 : i32, i32, i32, i32, i32
  }
  func.func @transform_1(%arg0: i32) -> (i32, i32, i32, i32) {
    %c0_i32 = arith.constant 0 : i32
    %c0_i32_0 = arith.constant 0 : i32
    %c0_i32_1 = arith.constant 0 : i32
    %c0_i32_2 = arith.constant 0 : i32
    return %c0_i32, %arg0, %c0_i32_0, %c0_i32_1 : i32, i32, i32, i32
  }
}

</mosaic_0001>

<llo_original>
// kernel: tpu_custom_call.1
$region0: #{tpu_custom_call.1}
  #allocation0 [shape = 'u32[]', space=smem, size = 0x4, offset = 0x4, fixed_abs, tag = 'smem constant byte address 0x4 - core index']
  #allocation1 [shape = 'u32[144,128]{1,0:T(1,128)}', space=vmem, size = 0x12000, scoped, tag = 'internal scratch']
  #allocation6 [shape = 's32[]', space=sflag, size = 0x4, offset = 0, fixed_abs, tag = 'sflag constant byte address 0x0 - dummy sync flag']
  #allocation8 [shape = 's32[]', space=sflag, size = 0x4, offset = 0, fixed_abs, tag = 'sflag constant byte address 0x0 - dummy sync flag']
  %s0 = inlined_call_operand.hbm [shape: f32[2,8,2,8,8], index: 0, kind: input, shape index: {}]
  %s1 = inlined_call_operand.hbm [shape: f32[2,8,8,8], index: 1, kind: output, shape index: {}]
  %s2 = sld [smem:[#allocation0]]
  $region41: #{tpu_custom_call.1} parent=0
    _
  %s4 = ssub.s32 1, %s2
  %s5 = scalar_select 0, %s4, %s2
  $region1: #{tpu_custom_call.1} parent=0
    #allocation2 [shape = 'u8[65536]{0}', space=vmem, size = 0x10000, scoped, tag = 'input window, operand 0']
    #allocation3 [shape = 's32[2]{0}', space=sflag, size = 0x8, scoped, tag = 'scoped memory for tpu_custom_call.1']
    #allocation4 [shape = 's32[2]{0}', space=sflag, size = 0x8, scoped, tag = 'scoped memory for tpu_custom_call.1']
    #allocation5 [shape = 'u8[65536]{0}', space=vmem, size = 0x10000, scoped, tag = 'output window, operand 0']
    %6 = vsyncpa [#allocation3], 0
    %s7 = scalar_lea.sflag [#allocation3], 1
    %8 = vsyncpa %s7, 0
    %9 = vsyncpa [#allocation4], 0
    %s10 = scalar_lea.sflag [#allocation4], 1
    %11 = vsyncpa %s10, 0
    loop: start=0, step=1, limit=4
    $region2: #{tpu_custom_call.1} parent=1 // loop_pre_header
      _
    $region3: #{tpu_custom_call.1} parent=1 // loop_header
      %s13 = sphi 0, %s17
      %p14 = scmp.ge.s32.totalorder %s13, 4
      %s23 = sphi 0, %s25
      %s26 = sphi 0, %s23
      %s27 = sphi 0, %s26
      %s43 = sphi 0, %s27
      %s49 = sphi 0, %s51
      %s52 = sphi 0, %s49
      %s53 = sphi 0, %s52
      %s69 = sphi 0, %s53
    $region4: #{tpu_custom_call.1} parent=1 // loop_header_branch
      %16 = sbr.rel (%p14) target = $region8
    $region5: #{tpu_custom_call.1} parent=1 // loop_body
      %s18 = ssub.s32 %s13, 1
      %s19 = ssub.s32 %s13, 2
      %s20 = sadd.s32 %s13, 1
      %s21 = ssub.s32 %s13, %s20
      %p22 = scmp.eq.s32.totalorder %s21, 0
      %s24 = sadd.s32 %s23, 1
      %s25 = scalar_select %p22, %s23, %s24
      %p28 = pneg %p22
      %p29 = scmp.eq.s32.totalorder %s13, 1
      %p30 = por %p28, %p29
      %p31 = scmp.ne.s32.totalorder %s23, %s26
      %p32 = scmp.eq.s32.totalorder %s13, 0
      %p33 = por %p31, %p32
      %p34 = scmp.ne.s32.totalorder %s23, %s26
      %p35 = scmp.eq.s32.totalorder %s18, 1
      %p36 = por %p34, %p35
      %p37 = scmp.ne.s32.totalorder %s26, %s27
      %p38 = scmp.eq.s32.totalorder %s18, 0
      %p39 = por %p37, %p38
      %p40 = scmp.ne.s32.totalorder %s26, %s27
      %p41 = scmp.eq.s32.totalorder %s19, 1
      %p42 = por %p40, %p41
      %p44 = scmp.ne.s32.totalorder %s27, %s43
      %p45 = scmp.eq.s32.totalorder %s19, 0
      %p46 = por %p44, %p45
      %s47 = ssub.s32 %s13, %s20
      %p48 = scmp.eq.s32.totalorder %s47, 0
      %s50 = sadd.s32 %s49, 1
      %s51 = scalar_select %p48, %s49, %s50
      %p54 = pneg %p48
      %p55 = scmp.eq.s32.totalorder %s13, 1
      %p56 = por %p54, %p55
      %p57 = scmp.ne.s32.totalorder %s49, %s52
      %p58 = scmp.eq.s32.totalorder %s13, 0
      %p59 = por %p57, %p58
      %p60 = scmp.ne.s32.totalorder %s49, %s52
      %p61 = scmp.eq.s32.totalorder %s18, 1
      %p62 = por %p60, %p61
      %p63 = scmp.ne.s32.totalorder %s52, %s53
      %p64 = scmp.eq.s32.totalorder %s18, 0
      %p65 = por %p63, %p64
      %p66 = scmp.ne.s32.totalorder %s52, %s53
      %p67 = scmp.eq.s32.totalorder %s19, 1
      %p68 = por %p66, %p67
      %p70 = scmp.ne.s32.totalorder %s53, %s69
      %p71 = scmp.eq.s32.totalorder %s19, 0
      %p72 = por %p70, %p71
      %p73 = scmp.le.s32.totalorder 1, %s13
      %p74 = scmp.lt.s32.totalorder %s13, 3
      %p75 = pnand %p73, %p74
      %p76 = pneg %p75
      // Predicated region
      $region9: #{tpu_custom_call.1} parent=5 // pred_check
        _
      $region10: #{tpu_custom_call.1} parent=5 // pred_check_branch
        %78 = sbr.rel (%p75) target = $region12
      $region11: #{tpu_custom_call.1} parent=5 // pred_region
        %s79 = ssub.s32 %s13, 1
      $region12: #{tpu_custom_call.1} parent=5 // pred_fallthru
        _
      %p80 = scmp.lt.s32.totalorder %s13, 2
      // Predicated region
      $region13: #{tpu_custom_call.1} parent=5 // pred_check
        %p81 = pneg %p80
      $region14: #{tpu_custom_call.1} parent=5 // pred_check_branch
        %83 = sbr.rel (%p81) target = $region16
      $region15: #{tpu_custom_call.1} parent=5 // pred_region
        // Predicated region
        $region17: #{tpu_custom_call.1} parent=15 // pred_check
          %p84 = pneg %p33
        $region18: #{tpu_custom_call.1} parent=15 // pred_check_branch
          %86 = sbr.rel (%p84) target = $region20
        $region19: #{tpu_custom_call.1} parent=15 // pred_region
          #allocation7 [shape = 'u32[6]{0}', space=smem, size = 0x18, scoped, tag = 'DMA stride descriptor']
          %s87 = sand.u32 %s23, 1
          %s88 = scalar_lea.sflag [#allocation3], %s87
          %s89 = sand.u32 %s23, 1
          %s90 = smul.addr %s89, 64
          %s91 = scalar_lea.vmem [#allocation2], %s90
          %s92 = smul.u32 4, %s13
          %s94 = ssub.s32 1024, 1024
          %95 = vsyncadd %s88, %s94
          %s96 = smul.addr %s92, 2
          %s97 = smul.addr %s96, 128
          %s98 = scalar_lea.hbm %s0, %s97
          %s100 = sshll.u32 1, 14
          %s101 = sxor.u32 4294967295, %s100
          %s103 = sld [smem:[#allocation0]]
          %s104 = sadd.s32 2, %s103
          %s106 = sshll.u32 7, 26
          %s107 = sxor.u32 4294967295, %s106
          %s108 = sand.u32 0, %s107
          %s109 = sshll.u32 %s104, 26
          %s110 = sor.u32 %s108, %s109
          %s111 = sshll.u32 %s91, 4
          %s112 = int_to_ptr.vmem [resolvable:$true] %s111
          %118 = sst [smem:[#allocation7]] 2048
          %s119 = scalar_lea.smem [#allocation7], 1
          %120 = sst [smem:[%s119]] 512
          %s121 = scalar_lea.smem [#allocation7], 2
          %122 = sst [smem:[%s121]] 4
          %s123 = scalar_lea.smem [#allocation7], 3
          %124 = sst [smem:[%s123]] 256
          %s125 = scalar_lea.smem [#allocation7], 4
          %126 = sst [smem:[%s125]] 128
          %s127 = scalar_lea.smem [#allocation7], 5
          %128 = sst [smem:[%s127]] 8
          %130 = dma.general %s98, 1024, %s112, %s88, [#allocation6], [#allocation7], %s110, 0
        $region20: #{tpu_custom_call.1} parent=15 // pred_fallthru
          _
      $region16: #{tpu_custom_call.1} parent=5 // pred_fallthru
        _
      %p131 = scmp.le.s32.totalorder 1, %s13
      %p132 = scmp.lt.s32.totalorder %s13, 3
      %p133 = pnand %p131, %p132
      %p134 = pneg %p133
      // Predicated region
      $region21: #{tpu_custom_call.1} parent=5 // pred_check
        _
      $region22: #{tpu_custom_call.1} parent=5 // pred_check_branch
        %136 = sbr.rel (%p133) target = $region24
      $region23: #{tpu_custom_call.1} parent=5 // pred_region
        %s137 = ssub.s32 %s13, 1
        %s138 = sand.u32 %s26, 1
        %s139 = scalar_lea.sflag [#allocation3], %s138
        %s140 = sand.u32 %s26, 1
        %s141 = smul.addr %s140, 64
        %s142 = scalar_lea.vmem [#allocation2], %s141
        // Predicated region
        $region25: #{tpu_custom_call.1} parent=23 // pred_check
          %p143 = pneg %p39
        $region26: #{tpu_custom_call.1} parent=23 // pred_check_branch
          %145 = sbr.rel (%p143) target = $region28
        $region27: #{tpu_custom_call.1} parent=23 // pred_region
          %146 = dma.done %s139, 1024
        $region28: #{tpu_custom_call.1} parent=23 // pred_fallthru
          _
        %s147 = sand.u32 %s26, 1
        %s148 = scalar_lea.sflag [#allocation3], %s147
        %s149 = sand.u32 %s26, 1
        %s150 = smul.addr %s149, 64
        %s151 = scalar_lea.vmem [#allocation2], %s150
        %p152 = pneg %p39
        %p153 = pneg %p36
        %p154 = pneg %p65
        %p155 = pneg %p62
        %s156 = sand.u32 %s52, 1
        %s157 = scalar_lea.sflag [#allocation4], %s156
        %s158 = sand.u32 %s52, 1
        %s159 = smul.addr %s158, 64
        %s160 = scalar_lea.vmem [#allocation5], %s159
        %s161 = smul.u32 4, %s18
        %s162 = smul.u32 4, %s18
        %v163 = vld [vmem:[%s142] sm:$0xff]
        %v164 = vld [vmem:[%s142 + $0x8] sm:$0xff]
        %v165 = vld [vmem:[%s142 + $0x10] sm:$0xff]
        %v166 = vld [vmem:[%s142 + $0x18] sm:$0xff]
        %v167 = vld [vmem:[%s142 + $0x20] sm:$0xff]
        %v168 = vld [vmem:[%s142 + $0x28] sm:$0xff]
        %v169 = vld [vmem:[%s142 + $0x30] sm:$0xff]
        %v170 = vld [vmem:[%s142 + $0x38] sm:$0xff]
        %179 = vrot.lane.b32.xlu0 %v163, 2
        %v180 = vpop.permute.xlu0 %179
        %181 = vrot.lane.b32.xlu0 %v164, 2
        %v182 = vpop.permute.xlu0 %181
        %183 = vrot.lane.b32.xlu0 %v165, 2
        %v184 = vpop.permute.xlu0 %183
        %185 = vrot.lane.b32.xlu0 %v166, 2
        %v186 = vpop.permute.xlu0 %185
        %187 = vrot.lane.b32.xlu0 %v167, 2
        %v188 = vpop.permute.xlu0 %187
        %189 = vrot.lane.b32.xlu0 %v168, 2
        %v190 = vpop.permute.xlu0 %189
        %191 = vrot.lane.b32.xlu0 %v169, 2
        %v192 = vpop.permute.xlu0 %191
        %193 = vrot.lane.b32.xlu0 %v170, 2
        %v194 = vpop.permute.xlu0 %193
        %vm203 = vcmask 15360
        %v204 = vsel %vm203, 0.0, %v180
        %v205 = vsel %vm203, 0.0, %v182
        %v206 = vsel %vm203, 0.0, %v184
        %v207 = vsel %vm203, 0.0, %v186
        %v208 = vsel %vm203, 0.0, %v188
        %v209 = vsel %vm203, 0.0, %v190
        %v210 = vsel %vm203, 0.0, %v192
        %v211 = vsel %vm203, 0.0, %v194
        %vm212 = vcmask 48128
        %v213 = vsel %vm212, %v204, 0.0
        %v214 = vsel %vm212, %v205, 0.0
        %v215 = vsel %vm212, %v206, 0.0
        %v216 = vsel %vm212, %v207, 0.0
        %v217 = vsel %vm212, %v208, 0.0
        %v218 = vsel %vm212, %v209, 0.0
        %v219 = vsel %vm212, %v210, 0.0
        %v220 = vsel %vm212, %v211, 0.0
        %vm221 = vcmask 64512
        %222 = vst.msk [vmem:[%s160] sm:$0xff] %vm221, %v213
        %223 = vst.msk [vmem:[%s160 + $0x8] sm:$0xff] %vm221, %v214
        %224 = vst.msk [vmem:[%s160 + $0x10] sm:$0xff] %vm221, %v215
        %225 = vst.msk [vmem:[%s160 + $0x18] sm:$0xff] %vm221, %v216
        %226 = vst.msk [vmem:[%s160 + $0x20] sm:$0xff] %vm221, %v217
        %227 = vst.msk [vmem:[%s160 + $0x28] sm:$0xff] %vm221, %v218
        %228 = vst.msk [vmem:[%s160 + $0x30] sm:$0xff] %vm221, %v219
        %229 = vst.msk [vmem:[%s160 + $0x38] sm:$0xff] %vm221, %v220
        %s230 = sand.u32 %s52, 1
        %s231 = scalar_lea.sflag [#allocation4], %s230
        %s232 = sand.u32 %s52, 1
        %s233 = smul.addr %s232, 64
        %s234 = scalar_lea.vmem [#allocation5], %s233
        // Predicated region
        $region29: #{tpu_custom_call.1} parent=23 // pred_check
          %p235 = pneg %p62
        $region30: #{tpu_custom_call.1} parent=23 // pred_check_branch
          %237 = sbr.rel (%p235) target = $region32
        $region31: #{tpu_custom_call.1} parent=23 // pred_region
          #allocation9 [shape = 'u32[6]{0}', space=smem, size = 0x18, scoped, tag = 'DMA stride descriptor']
          %s238 = smul.u32 4, %s18
          %s240 = ssub.s32 1024, 1024
          %241 = vsyncadd %s231, %s240
          %s242 = smul.addr %s238, 128
          %s243 = scalar_lea.hbm %s1, %s242
          %s245 = sshll.u32 1, 14
          %s246 = sxor.u32 4294967295, %s245
          %s249 = sshll.u32 7, 18
          %s250 = sxor.u32 4294967295, %s249
          %s251 = sand.u32 0, %s250
          %s253 = sor.u32 %s251, 0
          %s255 = sshll.u32 3, 24
          %s256 = sxor.u32 4294967295, %s255
          %s257 = sand.u32 %s253, %s256
          %s259 = sor.u32 %s257, 0
          %s260 = sshll.u32 %s234, 4
          %s261 = int_to_ptr.vmem [resolvable:$true] %s260
          %267 = sst [smem:[#allocation9]] 512
          %s268 = scalar_lea.smem [#allocation9], 1
          %269 = sst [smem:[%s268]] 1024
          %s270 = scalar_lea.smem [#allocation9], 2
          %271 = sst [smem:[%s270]] 4
          %s272 = scalar_lea.smem [#allocation9], 3
          %273 = sst [smem:[%s272]] 128
          %s274 = scalar_lea.smem [#allocation9], 4
          %275 = sst [smem:[%s274]] 128
          %s276 = scalar_lea.smem [#allocation9], 5
          %277 = sst [smem:[%s276]] 8
          %279 = dma.general %s261, 1024, %s243, %s231, [#allocation8], [#allocation9], %s259, 0
        $region32: #{tpu_custom_call.1} parent=23 // pred_fallthru
          _
      $region24: #{tpu_custom_call.1} parent=5 // pred_fallthru
        _
      %p280 = scmp.le.s32.totalorder 2, %s13
      // Predicated region
      $region33: #{tpu_custom_call.1} parent=5 // pred_check
        %p281 = pneg %p280
      $region34: #{tpu_custom_call.1} parent=5 // pred_check_branch
        %283 = sbr.rel (%p281) target = $region36
      $region35: #{tpu_custom_call.1} parent=5 // pred_region
        %s284 = ssub.s32 %s13, 2
        // Predicated region
        $region37: #{tpu_custom_call.1} parent=35 // pred_check
          %p285 = pneg %p68
        $region38: #{tpu_custom_call.1} parent=35 // pred_check_branch
          %287 = sbr.rel (%p285) target = $region40
        $region39: #{tpu_custom_call.1} parent=35 // pred_region
          %s288 = sand.u32 %s53, 1
          %s289 = scalar_lea.sflag [#allocation4], %s288
          %s290 = sand.u32 %s53, 1
          %s291 = smul.addr %s290, 64
          %s292 = scalar_lea.vmem [#allocation5], %s291
          %293 = dma.done %s289, 1024
        $region40: #{tpu_custom_call.1} parent=35 // pred_fallthru
          _
      $region36: #{tpu_custom_call.1} parent=5 // pred_fallthru
        _
    $region6: #{tpu_custom_call.1} parent=1 // loop_footer
      %s17 = sadd.s32 1, %s13
    $region7: #{tpu_custom_call.1} parent=1 // loop_footer_branch
      %12 = sbr.rel target = $region3
    $region8: #{tpu_custom_call.1} parent=1 // loop_exit
      _
    %294 = vsyncpa [#allocation3], 1
    %s295 = scalar_lea.sflag [#allocation3], 1
    %296 = vsyncpa %s295, 1
    %297 = vsyncpa [#allocation4], 1
    %s298 = scalar_lea.sflag [#allocation4], 1
    %299 = vsyncpa %s298, 1

</llo_original>
